<compile_context>
chip_gen: v5e
topology: v5e:2x2
jax: 0.10.0
libtpu: 0.0.40
codegen_flags: <defaults>
</compile_context>

<pallas_src>
import functools

import jax
import jax.numpy as jnp
from jax.experimental import pallas as pl
from jax.experimental.pallas import tpu as pltpu


OUT_LOGITS = 2          # node vs. edge
OUT_SUB = 8             # sublane-padded logit count (kernel output is (OUT_SUB, M))
ROW_ALIGN = 128         # row tiles are multiples of 128 (lane axis of the output)

_VMEM_LIMIT_BYTES = 56 * 1024 * 1024   # fits under v7x's 64 MiB physical VMEM
_VMEM_TILE_BUDGET = 40 * 1024 * 1024   # target per-step working set for tm sizing

_SQRT_2_OVER_PI = 0.7978845608028654


def _round_up(x, m):
    return ((x + m - 1) // m) * m


def _gelu_tanh(x):
    # tanh-approximate GELU: tanh runs on the EUP (its own bundle slot) instead
    # of an erf polynomial occupying the 4 VALU slots.
    return 0.5 * x * (1.0 + jnp.tanh(_SQRT_2_OVER_PI * (x + 0.044715 * x * x * x)))


def _router_kernel(n_layers, compute_dtype, *refs):
    # refs = (x_ref, w0, b0, ..., w_{n-1}, b_{n-1}, wT_last, bT_last, o_ref)
    x_ref = refs[0]
    o_ref = refs[-1]
    wb = refs[1:-1]

    h = x_ref[...].astype(jnp.float32)                # (tm, d_model)

    # n_layers hidden projections, each followed by tanh-GELU.
    for li in range(n_layers):
        w = wb[2 * li][...]                           # (in, hidden), compute_dtype
        b = wb[2 * li + 1][...]                       # (1, hidden), f32
        h = jnp.dot(h.astype(compute_dtype), w,       # bf16 MXU, f32 accumulate
                    preferred_element_type=jnp.float32)
        h = _gelu_tanh(h + b)                         # f32 VPU/EUP math

    # Final projection, produced transposed: (OUT_SUB, hidden) @ (tm, hidden)^T
    # -> (OUT_SUB, tm). Logits land on sublanes, tokens stay lane-dense, so the
    # HBM writeback is narrow and unmasked.
    w_t = wb[2 * n_layers][...]                       # (OUT_SUB, hidden), compute_dtype
    b_t = wb[2 * n_layers + 1][...]                   # (OUT_SUB, 1), f32
    out_t = jax.lax.dot_general(
        w_t, h.astype(compute_dtype),
        dimension_numbers=(((1,), (1,)), ((), ())),
        preferred_element_type=jnp.float32)
    o_ref[...] = (out_t + b_t).astype(o_ref.dtype)


def _vmem_estimate(tm, d_model, hidden_dim, n_layers, compute_bytes):
    x_bytes = 2 * tm * d_model * 4                    # double-buffered f32 input tile
    out_bytes = 2 * OUT_SUB * tm * 4                  # double-buffered f32 output tile
    w_elems = (d_model * hidden_dim
               + (n_layers - 1) * hidden_dim * hidden_dim
               + OUT_SUB * hidden_dim)
    b_elems = n_layers * hidden_dim + OUT_SUB
    wb_bytes = 2 * (w_elems * compute_bytes + b_elems * 4)   # worst case: 2x buffered
    widest = max(d_model, hidden_dim)
    live_bytes = 2 * tm * widest * (4 + compute_bytes)       # live h + bf16 cast copies
    return x_bytes + out_bytes + wb_bytes + live_bytes


def _choose_tm(M, tm_req, d_model, hidden_dim, n_layers, compute_bytes):
    tm = _round_up(max(tm_req, ROW_ALIGN), ROW_ALIGN)
    tm = min(tm, _round_up(M, ROW_ALIGN))             # no bigger than the problem
    if _round_up(M, ROW_ALIGN) >= 2 * ROW_ALIGN:
        # Keep >= 2 grid steps so both v7x TensorCores get work.
        tm = min(tm, max(ROW_ALIGN, _round_up((M + 1) // 2, ROW_ALIGN)))
    # Shrink until the per-step working set fits the VMEM budget (v7x: 64 MiB).
    while (tm > ROW_ALIGN
           and _vmem_estimate(tm, d_model, hidden_dim, n_layers, compute_bytes)
           > _VMEM_TILE_BUDGET):
        tm = _round_up(tm // 2, ROW_ALIGN)
    return tm


def router_forward(hidden_states, params, *, n_layers=None, tm=512,
                   compute_dtype=jnp.bfloat16):
    """hidden_states: (B, S, d_model); params: [(W, b), ...] with W as (in, out).

    Returns (B, S, 2) routing logits in float32.
    """
    if n_layers is None:
        n_layers = len(params) - 1
    B, S, d_model = hidden_states.shape
    hidden_dim = params[0][0].shape[1]
    M = B * S

    compute_bytes = jnp.dtype(compute_dtype).itemsize
    tm_eff = _choose_tm(M, tm, d_model, hidden_dim, n_layers, compute_bytes)
    M_pad = _round_up(M, tm_eff)
    grid = (M_pad // tm_eff,)

    x = hidden_states.reshape(M, d_model)
    if M_pad != M:
        x = jnp.pad(x, ((0, M_pad - M), (0, 0)))

    # Weights become MXU operands in compute_dtype; biases stay f32 (VPU math).
    wb_inputs = []
    for li, (W, b) in enumerate(params):
        if li == n_layers:
            # Final layer: store transposed + sublane-padded -> (OUT_SUB, hidden).
            W = jnp.pad(W, ((0, 0), (0, OUT_SUB - W.shape[1]))).T
            b = jnp.pad(b, ((0, OUT_SUB - b.shape[0]),)).reshape(OUT_SUB, 1)
        else:
            b = b.reshape(1, -1)
        wb_inputs.append(W.astype(compute_dtype))
        wb_inputs.append(b.astype(jnp.float32))

    kernel = functools.partial(_router_kernel, n_layers, compute_dtype)

    flops = 2 * M_pad * (d_model * hidden_dim
                         + (n_layers - 1) * hidden_dim * hidden_dim
                         + hidden_dim * OUT_SUB)
    wb_bytes = sum(int(a.size) * a.dtype.itemsize for a in wb_inputs)
    cost = pl.CostEstimate(
        flops=flops,
        transcendentals=M_pad * hidden_dim * n_layers,
        bytes_accessed=M_pad * d_model * 4 + wb_bytes + OUT_SUB * M_pad * 4)

    out_shape = jax.ShapeDtypeStruct((OUT_SUB, M_pad), jnp.float32)
    out_spec = pl.BlockSpec((OUT_SUB, tm_eff), lambda i: (0, i))
    x_spec = pl.BlockSpec((tm_eff, d_model), lambda i: (i, 0))

    def _call(single_buffer_weights):
        wb_specs = []
        for arr in wb_inputs:
            kwargs = {}
            if single_buffer_weights:
                # Grid-invariant blocks: one VMEM buffer is enough.
                kwargs["pipeline_mode"] = pl.Buffered(1)
            wb_specs.append(pl.BlockSpec(arr.shape, lambda i: (0, 0), **kwargs))
        return pl.pallas_call(
            kernel,
            out_shape=out_shape,
            grid_spec=pltpu.PrefetchScalarGridSpec(
                num_scalar_prefetch=0,
                grid=grid,
                in_specs=[x_spec] + wb_specs,
                out_specs=out_spec),
            compiler_params=pltpu.CompilerParams(
                dimension_semantics=("parallel",),
                vmem_limit_bytes=_VMEM_LIMIT_BYTES),
            cost_estimate=cost,
        )(x, *wb_inputs)

    try:
        out_t = _call(True)
    except Exception:
        # pl.Buffered(1) single-buffering of grid-invariant blocks not supported
        # by this jax build; fall back to default double buffering (correct,
        # just slightly more weight VMEM).
        out_t = _call(False)

    logits_t = out_t[:OUT_LOGITS, :M]                 # (2, M) -- tiny slice/copy
    return logits_t.T.reshape(B, S, OUT_LOGITS)


def init_router_params(key, d_model, hidden_dim, n_layers):
    """Deterministic synthetic init matching the nn.Module's parameter shapes.

    Layer list: Linear(d_model,hidden), [Linear(hidden,hidden)]*(n_layers-1),
                Linear(hidden, 2).  Weights stored as (in, out) for x @ W + b.
    """
    dims = [(d_model, hidden_dim)]
    dims += [(hidden_dim, hidden_dim)] * (n_layers - 1)
    dims += [(hidden_dim, OUT_LOGITS)]
    params = []
    for fan_in, fan_out in dims:
        key, kw, kb = jax.random.split(key, 3)
        bound = 1.0 / (fan_in ** 0.5)
        W = jax.random.uniform(kw, (fan_in, fan_out), jnp.float32, -bound, bound)
        b = jax.random.uniform(kb, (fan_out,), jnp.float32, -bound, bound)
        params.append((W, b))
    return params


def router_reference_f32(hidden_states, params):
    """PyTorch-faithful reference: f32 matmuls + exact (erf) GELU."""
    h = hidden_states.astype(jnp.float32)
    for li, (W, b) in enumerate(params):
        h = h @ W + b
        if li != len(params) - 1:
            h = 0.5 * h * (1.0 + jax.lax.erf(h / jnp.sqrt(2.0)))
    return h


def router_reference_kernel_precision(hidden_states, params, compute_dtype):
    """Reference mirroring the kernel's bf16-MXU / tanh-GELU precision choices."""
    h = hidden_states.astype(jnp.float32)
    n_layers = len(params) - 1
    for li, (W, b) in enumerate(params):
        h = jnp.dot(h.astype(compute_dtype), W.astype(compute_dtype),
                    preferred_element_type=jnp.float32) + b.astype(jnp.float32)
        if li != n_layers:
            h = _gelu_tanh(h)
    return h


if __name__ == "__main__":
    # Small shapes consistent with the module's forward contract.
    batch, seq, d_model, hidden_dim, n_layers = 2, 8, 32, 64, 2

    key = jax.random.PRNGKey(0)
    key, kx = jax.random.split(key)
    x = jax.random.normal(kx, (batch, seq, d_model), jnp.float32)
    params = init_router_params(key, d_model, hidden_dim, n_layers)

    out = router_forward(x, params, n_layers=n_layers)
    out = jax.block_until_ready(out)
    assert out.shape == (batch, seq, OUT_LOGITS), out.shape

    # Tight check against a reference that uses the kernel's exact precision
    # (bf16 MXU operands, f32 accumulate, tanh GELU).
    ref_kp = router_reference_kernel_precision(x, params, jnp.bfloat16)
    assert jnp.allclose(out, ref_kp, atol=2e-3, rtol=2e-3), (
        float(jnp.max(jnp.abs(out - ref_kp))))

    # Loose check against the PyTorch-faithful f32 / erf-GELU forward; the
    # bf16 + tanh-GELU deltas are the intentional precision trades from the
    # performance review.
    ref_f32 = router_reference_f32(x, params)
    assert jnp.allclose(out, ref_f32, atol=5e-2, rtol=5e-2), (
        float(jnp.max(jnp.abs(out - ref_f32))))

    print("KERNEL_OK")
</pallas_src>

<mosaic_0001>
module attributes {stable_mosaic.version = 11 : i64} {
  func.func @_router_kernel(%arg0: i32, %arg1: memref<128x32xf32, #tpu.memory_space<vmem>>, %arg2: memref<32x64xbf16, #tpu.memory_space<vmem>>, %arg3: memref<1x64xf32, #tpu.memory_space<vmem>>, %arg4: memref<64x64xbf16, #tpu.memory_space<vmem>>, %arg5: memref<1x64xf32, #tpu.memory_space<vmem>>, %arg6: memref<8x64xbf16, #tpu.memory_space<vmem>>, %arg7: memref<8x1xf32, #tpu.memory_space<vmem>>, %arg8: memref<8x128xf32, #tpu.memory_space<vmem>>) attributes {dimension_semantics = [#tpu.dimension_semantics<parallel>], iteration_bounds = array<i64: 1>, scalar_prefetch = 0 : i64, scratch_operands = 0 : i64, tpu.core_type = #tpu.core_type<tc>, window_params = [{transform_indices = @transform_0, window_bounds = array<i64: 128, 32>}, {pipeline_mode = #tpu.pipeline_mode<synchronous>, transform_indices = @transform_1, window_bounds = array<i64: 32, 64>}, {pipeline_mode = #tpu.pipeline_mode<synchronous>, transform_indices = @transform_2, window_bounds = array<i64: 1, 64>}, {pipeline_mode = #tpu.pipeline_mode<synchronous>, transform_indices = @transform_3, window_bounds = array<i64: 64, 64>}, {pipeline_mode = #tpu.pipeline_mode<synchronous>, transform_indices = @transform_4, window_bounds = array<i64: 1, 64>}, {pipeline_mode = #tpu.pipeline_mode<synchronous>, transform_indices = @transform_5, window_bounds = array<i64: 8, 64>}, {pipeline_mode = #tpu.pipeline_mode<synchronous>, transform_indices = @transform_6, window_bounds = array<i64: 8, 1>}, {transform_indices = @transform_7, window_bounds = array<i64: 8, 128>}]} {
    %c0 = arith.constant 0 : index
    %c0_0 = arith.constant 0 : index
    %0 = vector.load %arg1[%c0, %c0_0] : memref<128x32xf32, #tpu.memory_space<vmem>>, vector<128x32xf32>
    %c0_1 = arith.constant 0 : index
    %c0_2 = arith.constant 0 : index
    %1 = vector.load %arg2[%c0_1, %c0_2] : memref<32x64xbf16, #tpu.memory_space<vmem>>, vector<32x64xbf16>
    %c0_3 = arith.constant 0 : index
    %c0_4 = arith.constant 0 : index
    %2 = vector.load %arg3[%c0_3, %c0_4] : memref<1x64xf32, #tpu.memory_space<vmem>>, vector<1x64xf32>
    %3 = arith.truncf %0 : vector<128x32xf32> to vector<128x32xbf16>
    %cst = arith.constant dense<0.000000e+00> : vector<128x64xf32>
    %4 = tpu.matmul %3, %1, %cst {dimension_numbers = #tpu.dot_dimension_numbers<[1], [0], [0], [1], [0, 0, 1, 1], [], []>} : vector<128x32xbf16>, vector<32x64xbf16>, vector<128x64xf32> -> vector<128x64xf32>
    %5 = vector.broadcast %2 : vector<1x64xf32> to vector<128x64xf32>
    %6 = arith.addf %4, %5 : vector<128x64xf32>
    %cst_5 = arith.constant 5.000000e-01 : f32
    %7 = vector.broadcast %cst_5 : f32 to vector<128x64xf32>
    %8 = arith.mulf %7, %6 : vector<128x64xf32>
    %cst_6 = arith.constant 4.471500e-02 : f32
    %9 = vector.broadcast %cst_6 : f32 to vector<128x64xf32>
    %10 = arith.mulf %9, %6 : vector<128x64xf32>
    %11 = arith.mulf %10, %6 : vector<128x64xf32>
    %12 = arith.mulf %11, %6 : vector<128x64xf32>
    %13 = arith.addf %6, %12 : vector<128x64xf32>
    %cst_7 = arith.constant 0.797884583 : f32
    %14 = vector.broadcast %cst_7 : f32 to vector<128x64xf32>
    %15 = arith.mulf %14, %13 : vector<128x64xf32>
    %16 = math.tanh %15 : vector<128x64xf32>
    %cst_8 = arith.constant 1.000000e+00 : f32
    %17 = vector.broadcast %cst_8 : f32 to vector<128x64xf32>
    %18 = arith.addf %17, %16 : vector<128x64xf32>
    %19 = arith.mulf %8, %18 : vector<128x64xf32>
    %c0_9 = arith.constant 0 : index
    %c0_10 = arith.constant 0 : index
    %20 = vector.load %arg4[%c0_9, %c0_10] : memref<64x64xbf16, #tpu.memory_space<vmem>>, vector<64x64xbf16>
    %c0_11 = arith.constant 0 : index
    %c0_12 = arith.constant 0 : index
    %21 = vector.load %arg5[%c0_11, %c0_12] : memref<1x64xf32, #tpu.memory_space<vmem>>, vector<1x64xf32>
    %22 = arith.truncf %19 : vector<128x64xf32> to vector<128x64xbf16>
    %cst_13 = arith.constant dense<0.000000e+00> : vector<128x64xf32>
    %23 = tpu.matmul %22, %20, %cst_13 {dimension_numbers = #tpu.dot_dimension_numbers<[1], [0], [0], [1], [0, 0, 1, 1], [], []>} : vector<128x64xbf16>, vector<64x64xbf16>, vector<128x64xf32> -> vector<128x64xf32>
    %24 = vector.broadcast %21 : vector<1x64xf32> to vector<128x64xf32>
    %25 = arith.addf %23, %24 : vector<128x64xf32>
    %cst_14 = arith.constant 5.000000e-01 : f32
    %26 = vector.broadcast %cst_14 : f32 to vector<128x64xf32>
    %27 = arith.mulf %26, %25 : vector<128x64xf32>
    %cst_15 = arith.constant 4.471500e-02 : f32
    %28 = vector.broadcast %cst_15 : f32 to vector<128x64xf32>
    %29 = arith.mulf %28, %25 : vector<128x64xf32>
    %30 = arith.mulf %29, %25 : vector<128x64xf32>
    %31 = arith.mulf %30, %25 : vector<128x64xf32>
    %32 = arith.addf %25, %31 : vector<128x64xf32>
    %cst_16 = arith.constant 0.797884583 : f32
    %33 = vector.broadcast %cst_16 : f32 to vector<128x64xf32>
    %34 = arith.mulf %33, %32 : vector<128x64xf32>
    %35 = math.tanh %34 : vector<128x64xf32>
    %cst_17 = arith.constant 1.000000e+00 : f32
    %36 = vector.broadcast %cst_17 : f32 to vector<128x64xf32>
    %37 = arith.addf %36, %35 : vector<128x64xf32>
    %38 = arith.mulf %27, %37 : vector<128x64xf32>
    %c0_18 = arith.constant 0 : index
    %c0_19 = arith.constant 0 : index
    %39 = vector.load %arg6[%c0_18, %c0_19] : memref<8x64xbf16, #tpu.memory_space<vmem>>, vector<8x64xbf16>
    %c0_20 = arith.constant 0 : index
    %c0_21 = arith.constant 0 : index
    %40 = vector.load %arg7[%c0_20, %c0_21] : memref<8x1xf32, #tpu.memory_space<vmem>>, vector<8x1xf32>
    %41 = arith.truncf %38 : vector<128x64xf32> to vector<128x64xbf16>
    %cst_22 = arith.constant dense<0.000000e+00> : vector<8x128xf32>
    %42 = tpu.matmul %39, %41, %cst_22 {dimension_numbers = #tpu.dot_dimension_numbers<[1], [1], [0], [0], [0, 0, 1, 0], [], []>} : vector<8x64xbf16>, vector<128x64xbf16>, vector<8x128xf32> -> vector<8x128xf32>
    %43 = vector.broadcast %40 : vector<8x1xf32> to vector<8x128xf32>
    %44 = arith.addf %42, %43 : vector<8x128xf32>
    %c0_23 = arith.constant 0 : index
    %c0_24 = arith.constant 0 : index
    %45 = vector.load %arg8[%c0_23, %c0_24] : memref<8x128xf32, #tpu.memory_space<vmem>>, vector<8x128xf32>
    tpu.vector_store %arg8[%c0_23, %c0_24], %44 {strides = array<i32>} : memref<8x128xf32, #tpu.memory_space<vmem>>, vector<8x128xf32>,
    return
  }
  func.func @transform_0(%arg0: i32) -> (i32, i32) {
    %c0_i32 = arith.constant 0 : i32
    %c0_i32_0 = arith.constant 0 : i32
    return %arg0, %c0_i32 : i32, i32
  }
  func.func @transform_1(%arg0: i32) -> (i32, i32) {
    %c0_i32 = arith.constant 0 : i32
    %c0_i32_0 = arith.constant 0 : i32
    %c0_i32_1 = arith.constant 0 : i32
    return %c0_i32, %c0_i32_0 : i32, i32
  }
  func.func @transform_2(%arg0: i32) -> (i32, i32) {
    %c0_i32 = arith.constant 0 : i32
    %c0_i32_0 = arith.constant 0 : i32
    %c0_i32_1 = arith.constant 0 : i32
    return %c0_i32, %c0_i32_0 : i32, i32
  }
  func.func @transform_3(%arg0: i32) -> (i32, i32) {
    %c0_i32 = arith.constant 0 : i32
    %c0_i32_0 = arith.constant 0 : i32
    %c0_i32_1 = arith.constant 0 : i32
    return %c0_i32, %c0_i32_0 : i32, i32
  }
  func.func @transform_4(%arg0: i32) -> (i32, i32) {
    %c0_i32 = arith.constant 0 : i32
    %c0_i32_0 = arith.constant 0 : i32
    %c0_i32_1 = arith.constant 0 : i32
    return %c0_i32, %c0_i32_0 : i32, i32
  }
  func.func @transform_5(%arg0: i32) -> (i32, i32) {
    %c0_i32 = arith.constant 0 : i32
    %c0_i32_0 = arith.constant 0 : i32
    %c0_i32_1 = arith.constant 0 : i32
    return %c0_i32, %c0_i32_0 : i32, i32
  }
  func.func @transform_6(%arg0: i32) -> (i32, i32) {
    %c0_i32 = arith.constant 0 : i32
    %c0_i32_0 = arith.constant 0 : i32
    %c0_i32_1 = arith.constant 0 : i32
    return %c0_i32, %c0_i32_0 : i32, i32
  }
  func.func @transform_7(%arg0: i32) -> (i32, i32) {
    %c0_i32 = arith.constant 0 : i32
    %c0_i32_0 = arith.constant 0 : i32
    return %c0_i32, %arg0 : i32, i32
  }
}

module attributes {stable_mosaic.version = 11 : i64} {
  func.func @_router_kernel(%arg0: i32, %arg1: memref<128x32xf32, #tpu.memory_space<vmem>>, %arg2: memref<32x64xbf16, #tpu.memory_space<vmem>>, %arg3: memref<1x64xf32, #tpu.memory_space<vmem>>, %arg4: memref<64x64xbf16, #tpu.memory_space<vmem>>, %arg5: memref<1x64xf32, #tpu.memory_space<vmem>>, %arg6: memref<8x64xbf16, #tpu.memory_space<vmem>>, %arg7: memref<8x1xf32, #tpu.memory_space<vmem>>, %arg8: memref<8x128xf32, #tpu.memory_space<vmem>>) attributes {dimension_semantics = [#tpu.dimension_semantics<parallel>], iteration_bounds = array<i64: 1>, scalar_prefetch = 0 : i64, scratch_operands = 0 : i64, tpu.core_type = #tpu.core_type<tc>, window_params = [{transform_indices = @transform_0, window_bounds = array<i64: 128, 32>}, {pipeline_mode = #tpu.pipeline_mode<synchronous>, transform_indices = @transform_1, window_bounds = array<i64: 32, 64>}, {pipeline_mode = #tpu.pipeline_mode<synchronous>, transform_indices = @transform_2, window_bounds = array<i64: 1, 64>}, {pipeline_mode = #tpu.pipeline_mode<synchronous>, transform_indices = @transform_3, window_bounds = array<i64: 64, 64>}, {pipeline_mode = #tpu.pipeline_mode<synchronous>, transform_indices = @transform_4, window_bounds = array<i64: 1, 64>}, {pipeline_mode = #tpu.pipeline_mode<synchronous>, transform_indices = @transform_5, window_bounds = array<i64: 8, 64>}, {pipeline_mode = #tpu.pipeline_mode<synchronous>, transform_indices = @transform_6, window_bounds = array<i64: 8, 1>}, {transform_indices = @transform_7, window_bounds = array<i64: 8, 128>}]} {
    %c0 = arith.constant 0 : index
    %c0_0 = arith.constant 0 : index
    %0 = vector.load %arg1[%c0, %c0_0] : memref<128x32xf32, #tpu.memory_space<vmem>>, vector<128x32xf32>
    %c0_1 = arith.constant 0 : index
    %c0_2 = arith.constant 0 : index
    %1 = vector.load %arg2[%c0_1, %c0_2] : memref<32x64xbf16, #tpu.memory_space<vmem>>, vector<32x64xbf16>
    %c0_3 = arith.constant 0 : index
    %c0_4 = arith.constant 0 : index
    %2 = vector.load %arg3[%c0_3, %c0_4] : memref<1x64xf32, #tpu.memory_space<vmem>>, vector<1x64xf32>
    %3 = arith.truncf %0 : vector<128x32xf32> to vector<128x32xbf16>
    %cst = arith.constant dense<0.000000e+00> : vector<128x64xf32>
    %4 = tpu.matmul %3, %1, %cst {dimension_numbers = #tpu.dot_dimension_numbers<[1], [0], [0], [1], [0, 0, 1, 1], [], []>} : vector<128x32xbf16>, vector<32x64xbf16>, vector<128x64xf32> -> vector<128x64xf32>
    %5 = vector.broadcast %2 : vector<1x64xf32> to vector<128x64xf32>
    %6 = arith.addf %4, %5 : vector<128x64xf32>
    %cst_5 = arith.constant 5.000000e-01 : f32
    %7 = vector.broadcast %cst_5 : f32 to vector<128x64xf32>
    %8 = arith.mulf %7, %6 : vector<128x64xf32>
    %cst_6 = arith.constant 4.471500e-02 : f32
    %9 = vector.broadcast %cst_6 : f32 to vector<128x64xf32>
    %10 = arith.mulf %9, %6 : vector<128x64xf32>
    %11 = arith.mulf %10, %6 : vector<128x64xf32>
    %12 = arith.mulf %11, %6 : vector<128x64xf32>
    %13 = arith.addf %6, %12 : vector<128x64xf32>
    %cst_7 = arith.constant 0.797884583 : f32
    %14 = vector.broadcast %cst_7 : f32 to vector<128x64xf32>
    %15 = arith.mulf %14, %13 : vector<128x64xf32>
    %16 = math.tanh %15 : vector<128x64xf32>
    %cst_8 = arith.constant 1.000000e+00 : f32
    %17 = vector.broadcast %cst_8 : f32 to vector<128x64xf32>
    %18 = arith.addf %17, %16 : vector<128x64xf32>
    %19 = arith.mulf %8, %18 : vector<128x64xf32>
    %c0_9 = arith.constant 0 : index
    %c0_10 = arith.constant 0 : index
    %20 = vector.load %arg4[%c0_9, %c0_10] : memref<64x64xbf16, #tpu.memory_space<vmem>>, vector<64x64xbf16>
    %c0_11 = arith.constant 0 : index
    %c0_12 = arith.constant 0 : index
    %21 = vector.load %arg5[%c0_11, %c0_12] : memref<1x64xf32, #tpu.memory_space<vmem>>, vector<1x64xf32>
    %22 = arith.truncf %19 : vector<128x64xf32> to vector<128x64xbf16>
    %cst_13 = arith.constant dense<0.000000e+00> : vector<128x64xf32>
    %23 = tpu.matmul %22, %20, %cst_13 {dimension_numbers = #tpu.dot_dimension_numbers<[1], [0], [0], [1], [0, 0, 1, 1], [], []>} : vector<128x64xbf16>, vector<64x64xbf16>, vector<128x64xf32> -> vector<128x64xf32>
    %24 = vector.broadcast %21 : vector<1x64xf32> to vector<128x64xf32>
    %25 = arith.addf %23, %24 : vector<128x64xf32>
    %cst_14 = arith.constant 5.000000e-01 : f32
    %26 = vector.broadcast %cst_14 : f32 to vector<128x64xf32>
    %27 = arith.mulf %26, %25 : vector<128x64xf32>
    %cst_15 = arith.constant 4.471500e-02 : f32
    %28 = vector.broadcast %cst_15 : f32 to vector<128x64xf32>
    %29 = arith.mulf %28, %25 : vector<128x64xf32>
    %30 = arith.mulf %29, %25 : vector<128x64xf32>
    %31 = arith.mulf %30, %25 : vector<128x64xf32>
    %32 = arith.addf %25, %31 : vector<128x64xf32>
    %cst_16 = arith.constant 0.797884583 : f32
    %33 = vector.broadcast %cst_16 : f32 to vector<128x64xf32>
    %34 = arith.mulf %33, %32 : vector<128x64xf32>
    %35 = math.tanh %34 : vector<128x64xf32>
    %cst_17 = arith.constant 1.000000e+00 : f32
    %36 = vector.broadcast %cst_17 : f32 to vector<128x64xf32>
    %37 = arith.addf %36, %35 : vector<128x64xf32>
    %38 = arith.mulf %27, %37 : vector<128x64xf32>
    %c0_18 = arith.constant 0 : index
    %c0_19 = arith.constant 0 : index
    %39 = vector.load %arg6[%c0_18, %c0_19] : memref<8x64xbf16, #tpu.memory_space<vmem>>, vector<8x64xbf16>
    %c0_20 = arith.constant 0 : index
    %c0_21 = arith.constant 0 : index
    %40 = vector.load %arg7[%c0_20, %c0_21] : memref<8x1xf32, #tpu.memory_space<vmem>>, vector<8x1xf32>
    %41 = arith.truncf %38 : vector<128x64xf32> to vector<128x64xbf16>
    %cst_22 = arith.constant dense<0.000000e+00> : vector<8x128xf32>
    %42 = tpu.matmul %39, %41, %cst_22 {dimension_numbers = #tpu.dot_dimension_numbers<[1], [1], [0], [0], [0, 0, 1, 0], [], []>} : vector<8x64xbf16>, vector<128x64xbf16>, vector<8x128xf32> -> vector<8x128xf32>
    %43 = vector.broadcast %40 : vector<8x1xf32> to vector<8x128xf32>
    %44 = arith.addf %42, %43 : vector<8x128xf32>
    %c0_23 = arith.constant 0 : index
    %c0_24 = arith.constant 0 : index
    %45 = vector.load %arg8[%c0_23, %c0_24] : memref<8x128xf32, #tpu.memory_space<vmem>>, vector<8x128xf32>
    tpu.vector_store %arg8[%c0_23, %c0_24], %44 {strides = array<i32>} : memref<8x128xf32, #tpu.memory_space<vmem>>, vector<8x128xf32>,
    return
  }
  func.func @transform_0(%arg0: i32) -> (i32, i32) {
    %c0_i32 = arith.constant 0 : i32
    %c0_i32_0 = arith.constant 0 : i32
    return %arg0, %c0_i32 : i32, i32
  }
  func.func @transform_1(%arg0: i32) -> (i32, i32) {
    %c0_i32 = arith.constant 0 : i32
    %c0_i32_0 = arith.constant 0 : i32
    %c0_i32_1 = arith.constant 0 : i32
    return %c0_i32, %c0_i32_0 : i32, i32
  }
  func.func @transform_2(%arg0: i32) -> (i32, i32) {
    %c0_i32 = arith.constant 0 : i32
    %c0_i32_0 = arith.constant 0 : i32
    %c0_i32_1 = arith.constant 0 : i32
    return %c0_i32, %c0_i32_0 : i32, i32
  }
  func.func @transform_3(%arg0: i32) -> (i32, i32) {
    %c0_i32 = arith.constant 0 : i32
    %c0_i32_0 = arith.constant 0 : i32
    %c0_i32_1 = arith.constant 0 : i32
    return %c0_i32, %c0_i32_0 : i32, i32
  }
  func.func @transform_4(%arg0: i32) -> (i32, i32) {
    %c0_i32 = arith.constant 0 : i32
    %c0_i32_0 = arith.constant 0 : i32
    %c0_i32_1 = arith.constant 0 : i32
    return %c0_i32, %c0_i32_0 : i32, i32
  }
  func.func @transform_5(%arg0: i32) -> (i32, i32) {
    %c0_i32 = arith.constant 0 : i32
    %c0_i32_0 = arith.constant 0 : i32
    %c0_i32_1 = arith.constant 0 : i32
    return %c0_i32, %c0_i32_0 : i32, i32
  }
  func.func @transform_6(%arg0: i32) -> (i32, i32) {
    %c0_i32 = arith.constant 0 : i32
    %c0_i32_0 = arith.constant 0 : i32
    %c0_i32_1 = arith.constant 0 : i32
    return %c0_i32, %c0_i32_0 : i32, i32
  }
  func.func @transform_7(%arg0: i32) -> (i32, i32) {
    %c0_i32 = arith.constant 0 : i32
    %c0_i32_0 = arith.constant 0 : i32
    return %c0_i32, %arg0 : i32, i32
  }
}

</mosaic_0001>

<llo_original>
// kernel: tpu_custom_call.1
$region0: #{tpu_custom_call.1}
  #allocation0 [shape = 'u32[]', space=smem, size = 0x4, offset = 0x4, fixed_abs, tag = 'smem constant byte address 0x4 - core index']
  #allocation1 [shape = 'u32[72,128]{1,0:T(1,128)}', space=vmem, size = 0x9000, scoped, tag = 'internal scratch']
  %s0 = inlined_call_operand.vmem [shape: f32[128,32], index: 0, kind: input, shape index: {}]
  %s1 = inlined_call_operand.vmem [shape: bf16[32,64], index: 1, kind: input, shape index: {}]
  %s2 = inlined_call_operand.vmem [shape: f32[1,64], index: 2, kind: input, shape index: {}]
  %s3 = inlined_call_operand.vmem [shape: bf16[64,64], index: 3, kind: input, shape index: {}]
  %s4 = inlined_call_operand.vmem [shape: f32[1,64], index: 4, kind: input, shape index: {}]
  %s5 = inlined_call_operand.vmem [shape: bf16[8,64], index: 5, kind: input, shape index: {}]
  %s6 = inlined_call_operand.vmem [shape: f32[8,1], index: 6, kind: input, shape index: {}]
  %s7 = inlined_call_operand.hbm [shape: f32[8,128], index: 7, kind: output, shape index: {}]
  %s8 = sld [smem:[#allocation0]]
  $region38: #{tpu_custom_call.1} parent=0
    _
  %s10 = ssub.s32 1, %s8
  %s11 = scalar_select 0, %s10, %s8
  $region1: #{tpu_custom_call.1} parent=0
    #allocation2 [shape = 'u8[4096]{0}', space=vmem, size = 0x1000, scoped, tag = 'output window, operand 0, single buffered']
    #allocation3 [shape = 's32[1]{0}', space=sflag, size = 0x4, scoped, tag = 'scoped memory for tpu_custom_call.1']
    %12 = vsyncpa [#allocation3], 0
    // Predicated region
    $region2: #{tpu_custom_call.1} parent=1 // pred_check
      _
    $region3: #{tpu_custom_call.1} parent=1 // pred_check_branch
      %14 = sbr.rel (0) target = $region5
    $region4: #{tpu_custom_call.1} parent=1 // pred_region
      _
    $region5: #{tpu_custom_call.1} parent=1 // pred_fallthru
      _
    // Predicated region
    $region6: #{tpu_custom_call.1} parent=1 // pred_check
      _
    $region7: #{tpu_custom_call.1} parent=1 // pred_check_branch
      %16 = sbr.rel (0) target = $region9
    $region8: #{tpu_custom_call.1} parent=1 // pred_region
      _
    $region9: #{tpu_custom_call.1} parent=1 // pred_fallthru
      _
    // Predicated region
    $region10: #{tpu_custom_call.1} parent=1 // pred_check
      _
    $region11: #{tpu_custom_call.1} parent=1 // pred_check_branch
      %18 = sbr.rel (0) target = $region13
    $region12: #{tpu_custom_call.1} parent=1 // pred_region
      _
    $region13: #{tpu_custom_call.1} parent=1 // pred_fallthru
      _
    // Predicated region
    $region14: #{tpu_custom_call.1} parent=1 // pred_check
      _
    $region15: #{tpu_custom_call.1} parent=1 // pred_check_branch
      %20 = sbr.rel (0) target = $region17
    $region16: #{tpu_custom_call.1} parent=1 // pred_region
      _
    $region17: #{tpu_custom_call.1} parent=1 // pred_fallthru
      _
    // Predicated region
    $region18: #{tpu_custom_call.1} parent=1 // pred_check
      _
    $region19: #{tpu_custom_call.1} parent=1 // pred_check_branch
      %22 = sbr.rel (0) target = $region21
    $region20: #{tpu_custom_call.1} parent=1 // pred_region
      _
    $region21: #{tpu_custom_call.1} parent=1 // pred_fallthru
      _
    // Predicated region
    $region22: #{tpu_custom_call.1} parent=1 // pred_check
      _
    $region23: #{tpu_custom_call.1} parent=1 // pred_check_branch
      %24 = sbr.rel (0) target = $region25
    $region24: #{tpu_custom_call.1} parent=1 // pred_region
      _
    $region25: #{tpu_custom_call.1} parent=1 // pred_fallthru
      _
    // Predicated region
    $region26: #{tpu_custom_call.1} parent=1 // pred_check
      _
    $region27: #{tpu_custom_call.1} parent=1 // pred_check_branch
      %26 = sbr.rel (0) target = $region29
    $region28: #{tpu_custom_call.1} parent=1 // pred_region
      _
    $region29: #{tpu_custom_call.1} parent=1 // pred_fallthru
      _
    %v28 = vld [vmem:[%s0] sm:$0xff]
    %v29 = vld [vmem:[%s0 + $0x8] sm:$0xff]
    %v30 = vld [vmem:[%s0 + $0x10] sm:$0xff]
    %v31 = vld [vmem:[%s0 + $0x18] sm:$0xff]
    %v32 = vld [vmem:[%s0 + $0x20] sm:$0xff]
    %v33 = vld [vmem:[%s0 + $0x28] sm:$0xff]
    %v34 = vld [vmem:[%s0 + $0x30] sm:$0xff]
    %v35 = vld [vmem:[%s0 + $0x38] sm:$0xff]
    %v36 = vld [vmem:[%s0 + $0x40] sm:$0xff]
    %v37 = vld [vmem:[%s0 + $0x48] sm:$0xff]
    %v38 = vld [vmem:[%s0 + $0x50] sm:$0xff]
    %v39 = vld [vmem:[%s0 + $0x58] sm:$0xff]
    %v40 = vld [vmem:[%s0 + $0x60] sm:$0xff]
    %v41 = vld [vmem:[%s0 + $0x68] sm:$0xff]
    %v42 = vld [vmem:[%s0 + $0x70] sm:$0xff]
    %v43 = vld [vmem:[%s0 + $0x78] sm:$0xff]
    %v44 = vld [vmem:[%s1] sm:$0xf]
    %v45 = vld [vmem:[%s1 + $0x4] sm:$0xf]
    %v46 = vld [vmem:[%s1 + $0x8] sm:$0xf]
    %v47 = vld [vmem:[%s1 + $0xc] sm:$0xf]
    %v48 = vld [vmem:[%s2] sm:$0x1]
    %v49 = vpack.c.bf16 %v29, %v28
    %v50 = vpack.c.bf16 %v31, %v30
    %v51 = vpack.c.bf16 %v33, %v32
    %v52 = vpack.c.bf16 %v35, %v34
    %v53 = vpack.c.bf16 %v37, %v36
    %v54 = vpack.c.bf16 %v39, %v38
    %v55 = vpack.c.bf16 %v41, %v40
    %v56 = vpack.c.bf16 %v43, %v42
    %v58 = vperm.slane %v48, 0
    %v64 = vunpack.c.l.b16 %v44
    %v65 = vunpack.c.l.b16 %v45
    %v66 = vunpack.c.l.b16 %v46
    %v67 = vunpack.c.l.b16 %v47
    %v68 = vpack.c.b16 %v65, %v64
    %v69 = vpack.c.b16 %v67, %v66
    %vm72 = vcmask 261120
    %v74 = vsel %vm72, %v49, 0
    %v77 = vsel %vm72, %v50, 0
    %v80 = vsel %vm72, %v51, 0
    %v83 = vsel %vm72, %v52, 0
    %v86 = vsel %vm72, %v53, 0
    %v89 = vsel %vm72, %v54, 0
    %v92 = vsel %vm72, %v55, 0
    %v95 = vsel %vm72, %v56, 0
    %97 = vmatpush.bf16.msra.mxu0 0
    %98 = vmatpush.bf16.msra.mxu0 0
    %99 = vmatpush.bf16.msra.mxu0 0
    %100 = vmatpush.bf16.msra.mxu0 0
    %101 = vmatpush.bf16.msra.mxu0 0
    %102 = vmatpush.bf16.msra.mxu0 0
    %103 = vmatpush.bf16.msra.mxu0 %v69
    %104 = vmatpush.bf16.msra.mxu0 %v68
    %105 = vmatmul.bf16.gmra.mxu0 %v74
    %v106 = vpop.f32.mrf.mxu0
    %v107 = vadd.f32 %v58, %v106
    %v108 = vpop.f32.mrf.mxu0
    %v109 = vadd.f32 %v58, %v108
    %110 = vmatmul.bf16.gmra.mxu0 %v77
    %v111 = vpop.f32.mrf.mxu0
    %v112 = vadd.f32 %v58, %v111
    %v113 = vpop.f32.mrf.mxu0
    %v114 = vadd.f32 %v58, %v113
    %115 = vmatmul.bf16.gmra.mxu0 %v80
    %v116 = vpop.f32.mrf.mxu0
    %v117 = vadd.f32 %v58, %v116
    %v118 = vpop.f32.mrf.mxu0
    %v119 = vadd.f32 %v58, %v118
    %120 = vmatmul.bf16.gmra.mxu0 %v83
    %v121 = vpop.f32.mrf.mxu0
    %v122 = vadd.f32 %v58, %v121
    %v123 = vpop.f32.mrf.mxu0
    %v124 = vadd.f32 %v58, %v123
    %125 = vmatmul.bf16.gmra.mxu0 %v86
    %v126 = vpop.f32.mrf.mxu0
    %v127 = vadd.f32 %v58, %v126
    %v128 = vpop.f32.mrf.mxu0
    %v129 = vadd.f32 %v58, %v128
    %130 = vmatmul.bf16.gmra.mxu0 %v89
    %v131 = vpop.f32.mrf.mxu0
    %v132 = vadd.f32 %v58, %v131
    %v133 = vpop.f32.mrf.mxu0
    %v134 = vadd.f32 %v58, %v133
    %135 = vmatmul.bf16.gmra.mxu0 %v92
    %v136 = vpop.f32.mrf.mxu0
    %v137 = vadd.f32 %v58, %v136
    %v138 = vpop.f32.mrf.mxu0
    %v139 = vadd.f32 %v58, %v138
    %140 = vmatmul.bf16.gmra.mxu0 %v95
    %v141 = vpop.f32.mrf.mxu0
    %v142 = vadd.f32 %v58, %v141
    %v143 = vpop.f32.mrf.mxu0
    %v144 = vadd.f32 %v58, %v143
    %145 = vdwg.mxu0
    %v146 = vmul.f32 %v107, 0.5
    %v147 = vmul.f32 %v109, 0.5
    %v148 = vmul.f32 %v112, 0.5
    %v149 = vmul.f32 %v114, 0.5
    %v150 = vmul.f32 %v117, 0.5
    %v151 = vmul.f32 %v119, 0.5
    %v152 = vmul.f32 %v122, 0.5
    %v153 = vmul.f32 %v124, 0.5
    %v154 = vmul.f32 %v127, 0.5
    %v155 = vmul.f32 %v129, 0.5
    %v156 = vmul.f32 %v132, 0.5
    %v157 = vmul.f32 %v134, 0.5
    %v158 = vmul.f32 %v137, 0.5
    %v159 = vmul.f32 %v139, 0.5
    %v160 = vmul.f32 %v142, 0.5
    %v161 = vmul.f32 %v144, 0.5
    %v162 = vmul.f32 %v107, 0.044715
    %v163 = vmul.f32 %v109, 0.044715
    %v164 = vmul.f32 %v112, 0.044715
    %v165 = vmul.f32 %v114, 0.044715
    %v166 = vmul.f32 %v117, 0.044715
    %v167 = vmul.f32 %v119, 0.044715
    %v168 = vmul.f32 %v122, 0.044715
    %v169 = vmul.f32 %v124, 0.044715
    %v170 = vmul.f32 %v127, 0.044715
    %v171 = vmul.f32 %v129, 0.044715
    %v172 = vmul.f32 %v132, 0.044715
    %v173 = vmul.f32 %v134, 0.044715
    %v174 = vmul.f32 %v137, 0.044715
    %v175 = vmul.f32 %v139, 0.044715
    %v176 = vmul.f32 %v142, 0.044715
    %v177 = vmul.f32 %v144, 0.044715
    %v178 = vmul.f32 %v162, %v107
    %v179 = vmul.f32 %v163, %v109
    %v180 = vmul.f32 %v164, %v112
    %v181 = vmul.f32 %v165, %v114
    %v182 = vmul.f32 %v166, %v117
    %v183 = vmul.f32 %v167, %v119
    %v184 = vmul.f32 %v168, %v122
    %v185 = vmul.f32 %v169, %v124
    %v186 = vmul.f32 %v170, %v127
    %v187 = vmul.f32 %v171, %v129
    %v188 = vmul.f32 %v172, %v132
    %v189 = vmul.f32 %v173, %v134
    %v190 = vmul.f32 %v174, %v137
    %v191 = vmul.f32 %v175, %v139
    %v192 = vmul.f32 %v176, %v142
    %v193 = vmul.f32 %v177, %v144
    %v194 = vmul.f32 %v178, %v107
    %v195 = vmul.f32 %v179, %v109
    %v196 = vmul.f32 %v180, %v112
    %v197 = vmul.f32 %v181, %v114
    %v198 = vmul.f32 %v182, %v117
    %v199 = vmul.f32 %v183, %v119
    %v200 = vmul.f32 %v184, %v122
    %v201 = vmul.f32 %v185, %v124
    %v202 = vmul.f32 %v186, %v127
    %v203 = vmul.f32 %v187, %v129
    %v204 = vmul.f32 %v188, %v132
    %v205 = vmul.f32 %v189, %v134
    %v206 = vmul.f32 %v190, %v137
    %v207 = vmul.f32 %v191, %v139
    %v208 = vmul.f32 %v192, %v142
    %v209 = vmul.f32 %v193, %v144
    %v210 = vadd.f32 %v107, %v194
    %v211 = vadd.f32 %v109, %v195
    %v212 = vadd.f32 %v112, %v196
    %v213 = vadd.f32 %v114, %v197
    %v214 = vadd.f32 %v117, %v198
    %v215 = vadd.f32 %v119, %v199
    %v216 = vadd.f32 %v122, %v200
    %v217 = vadd.f32 %v124, %v201
    %v218 = vadd.f32 %v127, %v202
    %v219 = vadd.f32 %v129, %v203
    %v220 = vadd.f32 %v132, %v204
    %v221 = vadd.f32 %v134, %v205
    %v222 = vadd.f32 %v137, %v206
    %v223 = vadd.f32 %v139, %v207
    %v224 = vadd.f32 %v142, %v208
    %v225 = vadd.f32 %v144, %v209
    %v226 = vmul.f32 %v210, 0.7978846
    %v227 = vmul.f32 %v211, 0.7978846
    %v228 = vmul.f32 %v212, 0.7978846
    %v229 = vmul.f32 %v213, 0.7978846
    %v230 = vmul.f32 %v214, 0.7978846
    %v231 = vmul.f32 %v215, 0.7978846
    %v232 = vmul.f32 %v216, 0.7978846
    %v233 = vmul.f32 %v217, 0.7978846
    %v234 = vmul.f32 %v218, 0.7978846
    %v235 = vmul.f32 %v219, 0.7978846
    %v236 = vmul.f32 %v220, 0.7978846
    %v237 = vmul.f32 %v221, 0.7978846
    %v238 = vmul.f32 %v222, 0.7978846
    %v239 = vmul.f32 %v223, 0.7978846
    %v240 = vmul.f32 %v224, 0.7978846
    %v241 = vmul.f32 %v225, 0.7978846
    %v242 = vtanh.pop %v226
    %v243 = vtanh.pop %v227
    %v244 = vtanh.pop %v228
    %v245 = vtanh.pop %v229
    %v246 = vtanh.pop %v230
    %v247 = vtanh.pop %v231
    %v248 = vtanh.pop %v232
    %v249 = vtanh.pop %v233
    %v250 = vtanh.pop %v234
    %v251 = vtanh.pop %v235
    %v252 = vtanh.pop %v236
    %v253 = vtanh.pop %v237
    %v254 = vtanh.pop %v238
    %v255 = vtanh.pop %v239
    %v256 = vtanh.pop %v240
    %v257 = vtanh.pop %v241
    %v258 = vadd.f32 %v242, 1.0
    %v259 = vadd.f32 %v243, 1.0
    %v260 = vadd.f32 %v244, 1.0
    %v261 = vadd.f32 %v245, 1.0
    %v262 = vadd.f32 %v246, 1.0
    %v263 = vadd.f32 %v247, 1.0
    %v264 = vadd.f32 %v248, 1.0
    %v265 = vadd.f32 %v249, 1.0
    %v266 = vadd.f32 %v250, 1.0
    %v267 = vadd.f32 %v251, 1.0
    %v268 = vadd.f32 %v252, 1.0
    %v269 = vadd.f32 %v253, 1.0
    %v270 = vadd.f32 %v254, 1.0
    %v271 = vadd.f32 %v255, 1.0
    %v272 = vadd.f32 %v256, 1.0
    %v273 = vadd.f32 %v257, 1.0
    %v274 = vmul.f32 %v146, %v258
    %v275 = vmul.f32 %v147, %v259
    %v276 = vmul.f32 %v148, %v260
    %v277 = vmul.f32 %v149, %v261
    %v278 = vmul.f32 %v150, %v262
    %v279 = vmul.f32 %v151, %v263
    %v280 = vmul.f32 %v152, %v264
    %v281 = vmul.f32 %v153, %v265
    %v282 = vmul.f32 %v154, %v266
    %v283 = vmul.f32 %v155, %v267
    %v284 = vmul.f32 %v156, %v268
    %v285 = vmul.f32 %v157, %v269
    %v286 = vmul.f32 %v158, %v270
    %v287 = vmul.f32 %v159, %v271
    %v288 = vmul.f32 %v160, %v272
    %v289 = vmul.f32 %v161, %v273
    %v290 = vld [vmem:[%s3] sm:$0xf]
    %v291 = vld [vmem:[%s3 + $0x4] sm:$0xf]
    %v292 = vld [vmem:[%s3 + $0x8] sm:$0xf]
    %v293 = vld [vmem:[%s3 + $0xc] sm:$0xf]
    %v294 = vld [vmem:[%s3 + $0x10] sm:$0xf]
    %v295 = vld [vmem:[%s3 + $0x14] sm:$0xf]
    %v296 = vld [vmem:[%s3 + $0x18] sm:$0xf]
    %v297 = vld [vmem:[%s3 + $0x1c] sm:$0xf]
    %v298 = vld [vmem:[%s4] sm:$0x1]
    %v299 = vpack.c.bf16 %v275, %v274
    %v300 = vpack.c.bf16 %v277, %v276
    %v301 = vpack.c.bf16 %v279, %v278
    %v302 = vpack.c.bf16 %v281, %v280
    %v303 = vpack.c.bf16 %v283, %v282
    %v304 = vpack.c.bf16 %v285, %v284
    %v305 = vpack.c.bf16 %v287, %v286
    %v306 = vpack.c.bf16 %v289, %v288
    %v308 = vperm.slane %v298, 0
    %v318 = vunpack.c.l.b16 %v290
    %v319 = vunpack.c.l.b16 %v291
    %v320 = vunpack.c.l.b16 %v292
    %v321 = vunpack.c.l.b16 %v293
    %v322 = vunpack.c.l.b16 %v294
    %v323 = vunpack.c.l.b16 %v295
    %v324 = vunpack.c.l.b16 %v296
    %v325 = vunpack.c.l.b16 %v297
    %v326 = vpack.c.b16 %v319, %v318
    %v327 = vpack.c.b16 %v321, %v320
    %v328 = vpack.c.b16 %v323, %v322
    %v329 = vpack.c.b16 %v325, %v324
    %vm334 = vcmask 523264
    %v336 = vsel %vm334, %v299, 0
    %v339 = vsel %vm334, %v300, 0
    %v342 = vsel %vm334, %v301, 0
    %v345 = vsel %vm334, %v302, 0
    %v348 = vsel %vm334, %v303, 0
    %v351 = vsel %vm334, %v304, 0
    %v354 = vsel %vm334, %v305, 0
    %v357 = vsel %vm334, %v306, 0
    %359 = vmatpush.bf16.msra.mxu0 0
    %360 = vmatpush.bf16.msra.mxu0 0
    %361 = vmatpush.bf16.msra.mxu0 0
    %362 = vmatpush.bf16.msra.mxu0 0
    %363 = vmatpush.bf16.msra.mxu0 %v329
    %364 = vmatpush.bf16.msra.mxu0 %v328
    %365 = vmatpush.bf16.msra.mxu0 %v327
    %366 = vmatpush.bf16.msra.mxu0 %v326
    %367 = vmatmul.bf16.gmra.mxu0 %v336
    %v368 = vpop.f32.mrf.mxu0
    %v369 = vadd.f32 %v308, %v368
    %v370 = vpop.f32.mrf.mxu0
    %v371 = vadd.f32 %v308, %v370
    %372 = vmatmul.bf16.gmra.mxu0 %v339
    %v373 = vpop.f32.mrf.mxu0
    %v374 = vadd.f32 %v308, %v373
    %v375 = vpop.f32.mrf.mxu0
    %v376 = vadd.f32 %v308, %v375
    %377 = vmatmul.bf16.gmra.mxu0 %v342
    %v378 = vpop.f32.mrf.mxu0
    %v379 = vadd.f32 %v308, %v378
    %v380 = vpop.f32.mrf.mxu0
    %v381 = vadd.f32 %v308, %v380
    %382 = vmatmul.bf16.gmra.mxu0 %v345
    %v383 = vpop.f32.mrf.mxu0
    %v384 = vadd.f32 %v308, %v383
    %v385 = vpop.f32.mrf.mxu0
    %v386 = vadd.f32 %v308, %v385
    %387 = vmatmul.bf16.gmra.mxu0 %v348
    %v388 = vpop.f32.mrf.mxu0
    %v389 = vadd.f32 %v308, %v388
    %v390 = vpop.f32.mrf.mxu0
    %v391 = vadd.f32 %v308, %v390
    %392 = vmatmul.bf16.gmra.mxu0 %v351
    %v393 = vpop.f32.mrf.mxu0
    %v394 = vadd.f32 %v308, %v393
    %v395 = vpop.f32.mrf.mxu0
    %v396 = vadd.f32 %v308, %v395
    %397 = vmatmul.bf16.gmra.mxu0 %v354
    %v398 = vpop.f32.mrf.mxu0
    %v399 = vadd.f32 %v308, %v398
    %v400 = vpop.f32.mrf.mxu0
    %v401 = vadd.f32 %v308, %v400
    %402 = vmatmul.bf16.gmra.mxu0 %v357
    %v403 = vpop.f32.mrf.mxu0
    %v404 = vadd.f32 %v308, %v403
    %v405 = vpop.f32.mrf.mxu0
    %v406 = vadd.f32 %v308, %v405
    %407 = vdwg.mxu0
    %v408 = vmul.f32 %v369, 0.5
    %v409 = vmul.f32 %v371, 0.5
    %v410 = vmul.f32 %v374, 0.5
    %v411 = vmul.f32 %v376, 0.5
    %v412 = vmul.f32 %v379, 0.5
    %v413 = vmul.f32 %v381, 0.5
    %v414 = vmul.f32 %v384, 0.5
    %v415 = vmul.f32 %v386, 0.5
    %v416 = vmul.f32 %v389, 0.5
    %v417 = vmul.f32 %v391, 0.5
    %v418 = vmul.f32 %v394, 0.5
    %v419 = vmul.f32 %v396, 0.5
    %v420 = vmul.f32 %v399, 0.5
    %v421 = vmul.f32 %v401, 0.5
    %v422 = vmul.f32 %v404, 0.5
    %v423 = vmul.f32 %v406, 0.5
    %v424 = vmul.f32 %v369, 0.044715
    %v425 = vmul.f32 %v371, 0.044715
    %v426 = vmul.f32 %v374, 0.044715
    %v427 = vmul.f32 %v376, 0.044715
    %v428 = vmul.f32 %v379, 0.044715
    %v429 = vmul.f32 %v381, 0.044715
    %v430 = vmul.f32 %v384, 0.044715
    %v431 = vmul.f32 %v386, 0.044715
    %v432 = vmul.f32 %v389, 0.044715
    %v433 = vmul.f32 %v391, 0.044715
    %v434 = vmul.f32 %v394, 0.044715
    %v435 = vmul.f32 %v396, 0.044715
    %v436 = vmul.f32 %v399, 0.044715
    %v437 = vmul.f32 %v401, 0.044715
    %v438 = vmul.f32 %v404, 0.044715
    %v439 = vmul.f32 %v406, 0.044715
    %v440 = vmul.f32 %v424, %v369
    %v441 = vmul.f32 %v425, %v371
    %v442 = vmul.f32 %v426, %v374
    %v443 = vmul.f32 %v427, %v376
    %v444 = vmul.f32 %v428, %v379
    %v445 = vmul.f32 %v429, %v381
    %v446 = vmul.f32 %v430, %v384
    %v447 = vmul.f32 %v431, %v386
    %v448 = vmul.f32 %v432, %v389
    %v449 = vmul.f32 %v433, %v391
    %v450 = vmul.f32 %v434, %v394
    %v451 = vmul.f32 %v435, %v396
    %v452 = vmul.f32 %v436, %v399
    %v453 = vmul.f32 %v437, %v401
    %v454 = vmul.f32 %v438, %v404
    %v455 = vmul.f32 %v439, %v406
    %v456 = vmul.f32 %v440, %v369
    %v457 = vmul.f32 %v441, %v371
    %v458 = vmul.f32 %v442, %v374
    %v459 = vmul.f32 %v443, %v376
    %v460 = vmul.f32 %v444, %v379
    %v461 = vmul.f32 %v445, %v381
    %v462 = vmul.f32 %v446, %v384
    %v463 = vmul.f32 %v447, %v386
    %v464 = vmul.f32 %v448, %v389
    %v465 = vmul.f32 %v449, %v391
    %v466 = vmul.f32 %v450, %v394
    %v467 = vmul.f32 %v451, %v396
    %v468 = vmul.f32 %v452, %v399
    %v469 = vmul.f32 %v453, %v401
    %v470 = vmul.f32 %v454, %v404
    %v471 = vmul.f32 %v455, %v406
    %v472 = vadd.f32 %v369, %v456
    %v473 = vadd.f32 %v371, %v457
    %v474 = vadd.f32 %v374, %v458
    %v475 = vadd.f32 %v376, %v459
    %v476 = vadd.f32 %v379, %v460
    %v477 = vadd.f32 %v381, %v461
    %v478 = vadd.f32 %v384, %v462
    %v479 = vadd.f32 %v386, %v463
    %v480 = vadd.f32 %v389, %v464
    %v481 = vadd.f32 %v391, %v465
    %v482 = vadd.f32 %v394, %v466
    %v483 = vadd.f32 %v396, %v467
    %v484 = vadd.f32 %v399, %v468
    %v485 = vadd.f32 %v401, %v469
    %v486 = vadd.f32 %v404, %v470
    %v487 = vadd.f32 %v406, %v471
    %v488 = vmul.f32 %v472, 0.7978846
    %v489 = vmul.f32 %v473, 0.7978846
    %v490 = vmul.f32 %v474, 0.7978846
    %v491 = vmul.f32 %v475, 0.7978846
    %v492 = vmul.f32 %v476, 0.7978846
    %v493 = vmul.f32 %v477, 0.7978846
    %v494 = vmul.f32 %v478, 0.7978846
    %v495 = vmul.f32 %v479, 0.7978846
    %v496 = vmul.f32 %v480, 0.7978846
    %v497 = vmul.f32 %v481, 0.7978846
    %v498 = vmul.f32 %v482, 0.7978846
    %v499 = vmul.f32 %v483, 0.7978846
    %v500 = vmul.f32 %v484, 0.7978846
    %v501 = vmul.f32 %v485, 0.7978846
    %v502 = vmul.f32 %v486, 0.7978846
    %v503 = vmul.f32 %v487, 0.7978846
    %v504 = vtanh.pop %v488
    %v505 = vtanh.pop %v489
    %v506 = vtanh.pop %v490
    %v507 = vtanh.pop %v491
    %v508 = vtanh.pop %v492
    %v509 = vtanh.pop %v493
    %v510 = vtanh.pop %v494
    %v511 = vtanh.pop %v495
    %v512 = vtanh.pop %v496
    %v513 = vtanh.pop %v497
    %v514 = vtanh.pop %v498
    %v515 = vtanh.pop %v499
    %v516 = vtanh.pop %v500
    %v517 = vtanh.pop %v501
    %v518 = vtanh.pop %v502
    %v519 = vtanh.pop %v503
    %v520 = vadd.f32 %v504, 1.0
    %v521 = vadd.f32 %v505, 1.0
    %v522 = vadd.f32 %v506, 1.0
    %v523 = vadd.f32 %v507, 1.0
    %v524 = vadd.f32 %v508, 1.0
    %v525 = vadd.f32 %v509, 1.0
    %v526 = vadd.f32 %v510, 1.0
    %v527 = vadd.f32 %v511, 1.0
    %v528 = vadd.f32 %v512, 1.0
    %v529 = vadd.f32 %v513, 1.0
    %v530 = vadd.f32 %v514, 1.0
    %v531 = vadd.f32 %v515, 1.0
    %v532 = vadd.f32 %v516, 1.0
    %v533 = vadd.f32 %v517, 1.0
    %v534 = vadd.f32 %v518, 1.0
    %v535 = vadd.f32 %v519, 1.0
    %v536 = vmul.f32 %v408, %v520
    %v537 = vmul.f32 %v409, %v521
    %v538 = vmul.f32 %v410, %v522
    %v539 = vmul.f32 %v411, %v523
    %v540 = vmul.f32 %v412, %v524
    %v541 = vmul.f32 %v413, %v525
    %v542 = vmul.f32 %v414, %v526
    %v543 = vmul.f32 %v415, %v527
    %v544 = vmul.f32 %v416, %v528
    %v545 = vmul.f32 %v417, %v529
    %v546 = vmul.f32 %v418, %v530
    %v547 = vmul.f32 %v419, %v531
    %v548 = vmul.f32 %v420, %v532
    %v549 = vmul.f32 %v421, %v533
    %v550 = vmul.f32 %v422, %v534
    %v551 = vmul.f32 %v423, %v535
    %v552 = vld [vmem:[%s5] sm:$0xf]
    %v553 = vld [vmem:[%s6] sm:$0xff]
    %v554 = vpack.c.bf16 %v537, %v536
    %v555 = vpack.c.bf16 %v539, %v538
    %v556 = vpack.c.bf16 %v541, %v540
    %v557 = vpack.c.bf16 %v543, %v542
    %v558 = vpack.c.bf16 %v545, %v544
    %v559 = vpack.c.bf16 %v547, %v546
    %v560 = vpack.c.bf16 %v549, %v548
    %v561 = vpack.c.bf16 %v551, %v550
    %563 = vset.pattern.permute.xlu0 0
    %564 = vperm.xlu0 %563, %v553
    %v565 = vpop.permute.xlu0 %564
    %v568 = vsel %vm334, %v552, 0
    %v571 = vsel %vm334, %v554, 0
    %v574 = vsel %vm334, %v555, 0
    %v577 = vsel %vm334, %v556, 0
    %v580 = vsel %vm334, %v557, 0
    %v583 = vsel %vm334, %v558, 0
    %v586 = vsel %vm334, %v559, 0
    %v589 = vsel %vm334, %v560, 0
    %v592 = vsel %vm334, %v561, 0
    %594 = vmatpush.bf16.xpose.msra.mxu0 %v592
    %595 = vmatpush.bf16.xpose.msra.mxu0 %v589
    %596 = vmatpush.bf16.xpose.msra.mxu0 %v586
    %597 = vmatpush.bf16.xpose.msra.mxu0 %v583
    %598 = vmatpush.bf16.xpose.msra.mxu0 %v580
    %599 = vmatpush.bf16.xpose.msra.mxu0 %v577
    %600 = vmatpush.bf16.xpose.msra.mxu0 %v574
    %601 = vmatpush.bf16.xpose.msra.mxu0 %v571
    %602 = vmatmul.bf16.gmra.mxu0 %v568
    %v603 = vpop.f32.mrf.mxu0
    %v604 = vadd.f32 %v565, %v603
    %v605 = vpop.f32.mrf.mxu0
    %606 = vdwg.mxu0
    %607 = vst [vmem:[#allocation2] sm:$0xff] %v604
    // Predicated region
    $region30: #{tpu_custom_call.1} parent=1 // pred_check
      _
    $region31: #{tpu_custom_call.1} parent=1 // pred_check_branch
      %609 = sbr.rel (0) target = $region33
    $region32: #{tpu_custom_call.1} parent=1 // pred_region
      %611 = vsyncadd [#allocation3], 0
      %s613 = sshll.u32 [#allocation2], 4
      %s614 = int_to_ptr.vmem [resolvable:$true] %s613
      %s615 = sshll.u32 %s7, 4
      %s616 = int_to_ptr.hbm [resolvable:$true] %s615
      %618 = dma.vmem_to_hbm [thread:$0]  %s614, 128, %s616, [#allocation3]
    $region33: #{tpu_custom_call.1} parent=1 // pred_fallthru
      _
    // Predicated region
    $region34: #{tpu_custom_call.1} parent=1 // pred_check
      _
    $region35: #{tpu_custom_call.1} parent=1 // pred_check_branch
      %620 = sbr.rel (0) target = $region37
    $region36: #{tpu_custom_call.1} parent=1 // pred_region
      %622 = dma.done [#allocation3], 128
    $region37: #{tpu_custom_call.1} parent=1 // pred_fallthru
      _
    %623 = vsyncpa [#allocation3], 1

// kernel: tpu_custom_call.1
$region0: #{tpu_custom_call.1}
  #allocation0 [shape = 'u32[]', space=smem, size = 0x4, offset = 0x4, fixed_abs, tag = 'smem constant byte address 0x4 - core index']
  #allocation1 [shape = 'u32[72,128]{1,0:T(1,128)}', space=vmem, size = 0x9000, scoped, tag = 'internal scratch']
  %s0 = inlined_call_operand.vmem [shape: f32[128,32], index: 0, kind: input, shape index: {}]
  %s1 = inlined_call_operand.vmem [shape: bf16[32,64], index: 1, kind: input, shape index: {}]
  %s2 = inlined_call_operand.vmem [shape: f32[1,64], index: 2, kind: input, shape index: {}]
  %s3 = inlined_call_operand.vmem [shape: bf16[64,64], index: 3, kind: input, shape index: {}]
  %s4 = inlined_call_operand.vmem [shape: f32[1,64], index: 4, kind: input, shape index: {}]
  %s5 = inlined_call_operand.vmem [shape: bf16[8,64], index: 5, kind: input, shape index: {}]
  %s6 = inlined_call_operand.vmem [shape: f32[8,1], index: 6, kind: input, shape index: {}]
  %s7 = inlined_call_operand.hbm [shape: f32[8,128], index: 7, kind: output, shape index: {}]
  %s8 = sld [smem:[#allocation0]]
  $region38: #{tpu_custom_call.1} parent=0
    _
  %s10 = ssub.s32 1, %s8
  %s11 = scalar_select 0, %s10, %s8
  $region1: #{tpu_custom_call.1} parent=0
    #allocation2 [shape = 'u8[4096]{0}', space=vmem, size = 0x1000, scoped, tag = 'output window, operand 0, single buffered']
    #allocation3 [shape = 's32[1]{0}', space=sflag, size = 0x4, scoped, tag = 'scoped memory for tpu_custom_call.1']
    %12 = vsyncpa [#allocation3], 0
    // Predicated region
    $region2: #{tpu_custom_call.1} parent=1 // pred_check
      _
    $region3: #{tpu_custom_call.1} parent=1 // pred_check_branch
      %14 = sbr.rel (0) target = $region5
    $region4: #{tpu_custom_call.1} parent=1 // pred_region
      _
    $region5: #{tpu_custom_call.1} parent=1 // pred_fallthru
      _
    // Predicated region
    $region6: #{tpu_custom_call.1} parent=1 // pred_check
      _
    $region7: #{tpu_custom_call.1} parent=1 // pred_check_branch
      %16 = sbr.rel (0) target = $region9
    $region8: #{tpu_custom_call.1} parent=1 // pred_region
      _
    $region9: #{tpu_custom_call.1} parent=1 // pred_fallthru
      _
    // Predicated region
    $region10: #{tpu_custom_call.1} parent=1 // pred_check
      _
    $region11: #{tpu_custom_call.1} parent=1 // pred_check_branch
      %18 = sbr.rel (0) target = $region13
    $region12: #{tpu_custom_call.1} parent=1 // pred_region
      _
    $region13: #{tpu_custom_call.1} parent=1 // pred_fallthru
      _
    // Predicated region
    $region14: #{tpu_custom_call.1} parent=1 // pred_check
      _
    $region15: #{tpu_custom_call.1} parent=1 // pred_check_branch
      %20 = sbr.rel (0) target = $region17
    $region16: #{tpu_custom_call.1} parent=1 // pred_region
      _
    $region17: #{tpu_custom_call.1} parent=1 // pred_fallthru
      _
    // Predicated region
    $region18: #{tpu_custom_call.1} parent=1 // pred_check
      _
    $region19: #{tpu_custom_call.1} parent=1 // pred_check_branch
      %22 = sbr.rel (0) target = $region21
    $region20: #{tpu_custom_call.1} parent=1 // pred_region
      _
    $region21: #{tpu_custom_call.1} parent=1 // pred_fallthru
      _
    // Predicated region
    $region22: #{tpu_custom_call.1} parent=1 // pred_check
      _
    $region23: #{tpu_custom_call.1} parent=1 // pred_check_branch
      %24 = sbr.rel (0) target = $region25
    $region24: #{tpu_custom_call.1} parent=1 // pred_region
      _
    $region25: #{tpu_custom_call.1} parent=1 // pred_fallthru
      _
    // Predicated region
    $region26: #{tpu_custom_call.1} parent=1 // pred_check
      _
    $region27: #{tpu_custom_call.1} parent=1 // pred_check_branch
      %26 = sbr.rel (0) target = $region29
    $region28: #{tpu_custom_call.1} parent=1 // pred_region
      _
    $region29: #{tpu_custom_call.1} parent=1 // pred_fallthru
      _
    %v28 = vld [vmem:[%s0] sm:$0xff]
    %v29 = vld [vmem:[%s0 + $0x8] sm:$0xff]
    %v30 = vld [vmem:[%s0 + $0x10] sm:$0xff]
    %v31 = vld [vmem:[%s0 + $0x18] sm:$0xff]
    %v32 = vld [vmem:[%s0 + $0x20] sm:$0xff]
    %v33 = vld [vmem:[%s0 + $0x28] sm:$0xff]
    %v34 = vld [vmem:[%s0 + $0x30] sm:$0xff]
    %v35 = vld [vmem:[%s0 + $0x38] sm:$0xff]
    %v36 = vld [vmem:[%s0 + $0x40] sm:$0xff]
    %v37 = vld [vmem:[%s0 + $0x48] sm:$0xff]
    %v38 = vld [vmem:[%s0 + $0x50] sm:$0xff]
    %v39 = vld [vmem:[%s0 + $0x58] sm:$0xff]
    %v40 = vld [vmem:[%s0 + $0x60] sm:$0xff]
    %v41 = vld [vmem:[%s0 + $0x68] sm:$0xff]
    %v42 = vld [vmem:[%s0 + $0x70] sm:$0xff]
    %v43 = vld [vmem:[%s0 + $0x78] sm:$0xff]
    %v44 = vld [vmem:[%s1] sm:$0xf]
    %v45 = vld [vmem:[%s1 + $0x4] sm:$0xf]
    %v46 = vld [vmem:[%s1 + $0x8] sm:$0xf]
    %v47 = vld [vmem:[%s1 + $0xc] sm:$0xf]
    %v48 = vld [vmem:[%s2] sm:$0x1]
    %v49 = vpack.c.bf16 %v29, %v28
    %v50 = vpack.c.bf16 %v31, %v30
    %v51 = vpack.c.bf16 %v33, %v32
    %v52 = vpack.c.bf16 %v35, %v34
    %v53 = vpack.c.bf16 %v37, %v36
    %v54 = vpack.c.bf16 %v39, %v38
    %v55 = vpack.c.bf16 %v41, %v40
    %v56 = vpack.c.bf16 %v43, %v42
    %v58 = vperm.slane %v48, 0
    %v64 = vunpack.c.l.b16 %v44
    %v65 = vunpack.c.l.b16 %v45
    %v66 = vunpack.c.l.b16 %v46
    %v67 = vunpack.c.l.b16 %v47
    %v68 = vpack.c.b16 %v65, %v64
    %v69 = vpack.c.b16 %v67, %v66
    %vm72 = vcmask 261120
    %v74 = vsel %vm72, %v49, 0
    %v77 = vsel %vm72, %v50, 0
    %v80 = vsel %vm72, %v51, 0
    %v83 = vsel %vm72, %v52, 0
    %v86 = vsel %vm72, %v53, 0
    %v89 = vsel %vm72, %v54, 0
    %v92 = vsel %vm72, %v55, 0
    %v95 = vsel %vm72, %v56, 0
    %97 = vmatpush.bf16.msra.mxu0 0
    %98 = vmatpush.bf16.msra.mxu0 0
    %99 = vmatpush.bf16.msra.mxu0 0
    %100 = vmatpush.bf16.msra.mxu0 0
    %101 = vmatpush.bf16.msra.mxu0 0
    %102 = vmatpush.bf16.msra.mxu0 0
    %103 = vmatpush.bf16.msra.mxu0 %v69
    %104 = vmatpush.bf16.msra.mxu0 %v68
    %105 = vmatmul.bf16.gmra.mxu0 %v74
    %v106 = vpop.f32.mrf.mxu0
    %v107 = vadd.f32 %v58, %v106
    %v108 = vpop.f32.mrf.mxu0
    %v109 = vadd.f32 %v58, %v108
    %110 = vmatmul.bf16.gmra.mxu0 %v77
    %v111 = vpop.f32.mrf.mxu0
    %v112 = vadd.f32 %v58, %v111
    %v113 = vpop.f32.mrf.mxu0
    %v114 = vadd.f32 %v58, %v113
    %115 = vmatmul.bf16.gmra.mxu0 %v80
    %v116 = vpop.f32.mrf.mxu0
    %v117 = vadd.f32 %v58, %v116
    %v118 = vpop.f32.mrf.mxu0
    %v119 = vadd.f32 %v58, %v118
    %120 = vmatmul.bf16.gmra.mxu0 %v83
    %v121 = vpop.f32.mrf.mxu0
    %v122 = vadd.f32 %v58, %v121
    %v123 = vpop.f32.mrf.mxu0
    %v124 = vadd.f32 %v58, %v123
    %125 = vmatmul.bf16.gmra.mxu0 %v86
    %v126 = vpop.f32.mrf.mxu0
    %v127 = vadd.f32 %v58, %v126
    %v128 = vpop.f32.mrf.mxu0
    %v129 = vadd.f32 %v58, %v128
    %130 = vmatmul.bf16.gmra.mxu0 %v89
    %v131 = vpop.f32.mrf.mxu0
    %v132 = vadd.f32 %v58, %v131
    %v133 = vpop.f32.mrf.mxu0
    %v134 = vadd.f32 %v58, %v133
    %135 = vmatmul.bf16.gmra.mxu0 %v92
    %v136 = vpop.f32.mrf.mxu0
    %v137 = vadd.f32 %v58, %v136
    %v138 = vpop.f32.mrf.mxu0
    %v139 = vadd.f32 %v58, %v138
    %140 = vmatmul.bf16.gmra.mxu0 %v95
    %v141 = vpop.f32.mrf.mxu0
    %v142 = vadd.f32 %v58, %v141
    %v143 = vpop.f32.mrf.mxu0
    %v144 = vadd.f32 %v58, %v143
    %145 = vdwg.mxu0
    %v146 = vmul.f32 %v107, 0.5
    %v147 = vmul.f32 %v109, 0.5
    %v148 = vmul.f32 %v112, 0.5
    %v149 = vmul.f32 %v114, 0.5
    %v150 = vmul.f32 %v117, 0.5
    %v151 = vmul.f32 %v119, 0.5
    %v152 = vmul.f32 %v122, 0.5
    %v153 = vmul.f32 %v124, 0.5
    %v154 = vmul.f32 %v127, 0.5
    %v155 = vmul.f32 %v129, 0.5
    %v156 = vmul.f32 %v132, 0.5
    %v157 = vmul.f32 %v134, 0.5
    %v158 = vmul.f32 %v137, 0.5
    %v159 = vmul.f32 %v139, 0.5
    %v160 = vmul.f32 %v142, 0.5
    %v161 = vmul.f32 %v144, 0.5
    %v162 = vmul.f32 %v107, 0.044715
    %v163 = vmul.f32 %v109, 0.044715
    %v164 = vmul.f32 %v112, 0.044715
    %v165 = vmul.f32 %v114, 0.044715
    %v166 = vmul.f32 %v117, 0.044715
    %v167 = vmul.f32 %v119, 0.044715
    %v168 = vmul.f32 %v122, 0.044715
    %v169 = vmul.f32 %v124, 0.044715
    %v170 = vmul.f32 %v127, 0.044715
    %v171 = vmul.f32 %v129, 0.044715
    %v172 = vmul.f32 %v132, 0.044715
    %v173 = vmul.f32 %v134, 0.044715
    %v174 = vmul.f32 %v137, 0.044715
    %v175 = vmul.f32 %v139, 0.044715
    %v176 = vmul.f32 %v142, 0.044715
    %v177 = vmul.f32 %v144, 0.044715
    %v178 = vmul.f32 %v162, %v107
    %v179 = vmul.f32 %v163, %v109
    %v180 = vmul.f32 %v164, %v112
    %v181 = vmul.f32 %v165, %v114
    %v182 = vmul.f32 %v166, %v117
    %v183 = vmul.f32 %v167, %v119
    %v184 = vmul.f32 %v168, %v122
    %v185 = vmul.f32 %v169, %v124
    %v186 = vmul.f32 %v170, %v127
    %v187 = vmul.f32 %v171, %v129
    %v188 = vmul.f32 %v172, %v132
    %v189 = vmul.f32 %v173, %v134
    %v190 = vmul.f32 %v174, %v137
    %v191 = vmul.f32 %v175, %v139
    %v192 = vmul.f32 %v176, %v142
    %v193 = vmul.f32 %v177, %v144
    %v194 = vmul.f32 %v178, %v107
    %v195 = vmul.f32 %v179, %v109
    %v196 = vmul.f32 %v180, %v112
    %v197 = vmul.f32 %v181, %v114
    %v198 = vmul.f32 %v182, %v117
    %v199 = vmul.f32 %v183, %v119
    %v200 = vmul.f32 %v184, %v122
    %v201 = vmul.f32 %v185, %v124
    %v202 = vmul.f32 %v186, %v127
    %v203 = vmul.f32 %v187, %v129
    %v204 = vmul.f32 %v188, %v132
    %v205 = vmul.f32 %v189, %v134
    %v206 = vmul.f32 %v190, %v137
    %v207 = vmul.f32 %v191, %v139
    %v208 = vmul.f32 %v192, %v142
    %v209 = vmul.f32 %v193, %v144
    %v210 = vadd.f32 %v107, %v194
    %v211 = vadd.f32 %v109, %v195
    %v212 = vadd.f32 %v112, %v196
    %v213 = vadd.f32 %v114, %v197
    %v214 = vadd.f32 %v117, %v198
    %v215 = vadd.f32 %v119, %v199
    %v216 = vadd.f32 %v122, %v200
    %v217 = vadd.f32 %v124, %v201
    %v218 = vadd.f32 %v127, %v202
    %v219 = vadd.f32 %v129, %v203
    %v220 = vadd.f32 %v132, %v204
    %v221 = vadd.f32 %v134, %v205
    %v222 = vadd.f32 %v137, %v206
    %v223 = vadd.f32 %v139, %v207
    %v224 = vadd.f32 %v142, %v208
    %v225 = vadd.f32 %v144, %v209
    %v226 = vmul.f32 %v210, 0.7978846
    %v227 = vmul.f32 %v211, 0.7978846
    %v228 = vmul.f32 %v212, 0.7978846
    %v229 = vmul.f32 %v213, 0.7978846
    %v230 = vmul.f32 %v214, 0.7978846
    %v231 = vmul.f32 %v215, 0.7978846
    %v232 = vmul.f32 %v216, 0.7978846
    %v233 = vmul.f32 %v217, 0.7978846
    %v234 = vmul.f32 %v218, 0.7978846
    %v235 = vmul.f32 %v219, 0.7978846
    %v236 = vmul.f32 %v220, 0.7978846
    %v237 = vmul.f32 %v221, 0.7978846
    %v238 = vmul.f32 %v222, 0.7978846
    %v239 = vmul.f32 %v223, 0.7978846
    %v240 = vmul.f32 %v224, 0.7978846
    %v241 = vmul.f32 %v225, 0.7978846
    %v242 = vtanh.pop %v226
    %v243 = vtanh.pop %v227
    %v244 = vtanh.pop %v228
    %v245 = vtanh.pop %v229
    %v246 = vtanh.pop %v230
    %v247 = vtanh.pop %v231
    %v248 = vtanh.pop %v232
    %v249 = vtanh.pop %v233
    %v250 = vtanh.pop %v234
    %v251 = vtanh.pop %v235
    %v252 = vtanh.pop %v236
    %v253 = vtanh.pop %v237
    %v254 = vtanh.pop %v238
    %v255 = vtanh.pop %v239
    %v256 = vtanh.pop %v240
    %v257 = vtanh.pop %v241
    %v258 = vadd.f32 %v242, 1.0
    %v259 = vadd.f32 %v243, 1.0
    %v260 = vadd.f32 %v244, 1.0
    %v261 = vadd.f32 %v245, 1.0
    %v262 = vadd.f32 %v246, 1.0
    %v263 = vadd.f32 %v247, 1.0
    %v264 = vadd.f32 %v248, 1.0
    %v265 = vadd.f32 %v249, 1.0
    %v266 = vadd.f32 %v250, 1.0
    %v267 = vadd.f32 %v251, 1.0
    %v268 = vadd.f32 %v252, 1.0
    %v269 = vadd.f32 %v253, 1.0
    %v270 = vadd.f32 %v254, 1.0
    %v271 = vadd.f32 %v255, 1.0
    %v272 = vadd.f32 %v256, 1.0
    %v273 = vadd.f32 %v257, 1.0
    %v274 = vmul.f32 %v146, %v258
    %v275 = vmul.f32 %v147, %v259
    %v276 = vmul.f32 %v148, %v260
    %v277 = vmul.f32 %v149, %v261
    %v278 = vmul.f32 %v150, %v262
    %v279 = vmul.f32 %v151, %v263
    %v280 = vmul.f32 %v152, %v264
    %v281 = vmul.f32 %v153, %v265
    %v282 = vmul.f32 %v154, %v266
    %v283 = vmul.f32 %v155, %v267
    %v284 = vmul.f32 %v156, %v268
    %v285 = vmul.f32 %v157, %v269
    %v286 = vmul.f32 %v158, %v270
    %v287 = vmul.f32 %v159, %v271
    %v288 = vmul.f32 %v160, %v272
    %v289 = vmul.f32 %v161, %v273
    %v290 = vld [vmem:[%s3] sm:$0xf]
    %v291 = vld [vmem:[%s3 + $0x4] sm:$0xf]
    %v292 = vld [vmem:[%s3 + $0x8] sm:$0xf]
    %v293 = vld [vmem:[%s3 + $0xc] sm:$0xf]
    %v294 = vld [vmem:[%s3 + $0x10] sm:$0xf]
    %v295 = vld [vmem:[%s3 + $0x14] sm:$0xf]
    %v296 = vld [vmem:[%s3 + $0x18] sm:$0xf]
    %v297 = vld [vmem:[%s3 + $0x1c] sm:$0xf]
    %v298 = vld [vmem:[%s4] sm:$0x1]
    %v299 = vpack.c.bf16 %v275, %v274
    %v300 = vpack.c.bf16 %v277, %v276
    %v301 = vpack.c.bf16 %v279, %v278
    %v302 = vpack.c.bf16 %v281, %v280
    %v303 = vpack.c.bf16 %v283, %v282
    %v304 = vpack.c.bf16 %v285, %v284
    %v305 = vpack.c.bf16 %v287, %v286
    %v306 = vpack.c.bf16 %v289, %v288
    %v308 = vperm.slane %v298, 0
    %v318 = vunpack.c.l.b16 %v290
    %v319 = vunpack.c.l.b16 %v291
    %v320 = vunpack.c.l.b16 %v292
    %v321 = vunpack.c.l.b16 %v293
    %v322 = vunpack.c.l.b16 %v294
    %v323 = vunpack.c.l.b16 %v295
    %v324 = vunpack.c.l.b16 %v296
    %v325 = vunpack.c.l.b16 %v297
    %v326 = vpack.c.b16 %v319, %v318
    %v327 = vpack.c.b16 %v321, %v320
    %v328 = vpack.c.b16 %v323, %v322
    %v329 = vpack.c.b16 %v325, %v324
    %vm334 = vcmask 523264
    %v336 = vsel %vm334, %v299, 0
    %v339 = vsel %vm334, %v300, 0
    %v342 = vsel %vm334, %v301, 0
    %v345 = vsel %vm334, %v302, 0
    %v348 = vsel %vm334, %v303, 0
    %v351 = vsel %vm334, %v304, 0
    %v354 = vsel %vm334, %v305, 0
    %v357 = vsel %vm334, %v306, 0
    %359 = vmatpush.bf16.msra.mxu0 0
    %360 = vmatpush.bf16.msra.mxu0 0
    %361 = vmatpush.bf16.msra.mxu0 0
    %362 = vmatpush.bf16.msra.mxu0 0
    %363 = vmatpush.bf16.msra.mxu0 %v329
    %364 = vmatpush.bf16.msra.mxu0 %v328
    %365 = vmatpush.bf16.msra.mxu0 %v327
    %366 = vmatpush.bf16.msra.mxu0 %v326
    %367 = vmatmul.bf16.gmra.mxu0 %v336
    %v368 = vpop.f32.mrf.mxu0
    %v369 = vadd.f32 %v308, %v368
    %v370 = vpop.f32.mrf.mxu0
    %v371 = vadd.f32 %v308, %v370
    %372 = vmatmul.bf16.gmra.mxu0 %v339
    %v373 = vpop.f32.mrf.mxu0
    %v374 = vadd.f32 %v308, %v373
    %v375 = vpop.f32.mrf.mxu0
    %v376 = vadd.f32 %v308, %v375
    %377 = vmatmul.bf16.gmra.mxu0 %v342
    %v378 = vpop.f32.mrf.mxu0
    %v379 = vadd.f32 %v308, %v378
    %v380 = vpop.f32.mrf.mxu0
    %v381 = vadd.f32 %v308, %v380
    %382 = vmatmul.bf16.gmra.mxu0 %v345
    %v383 = vpop.f32.mrf.mxu0
    %v384 = vadd.f32 %v308, %v383
    %v385 = vpop.f32.mrf.mxu0
    %v386 = vadd.f32 %v308, %v385
    %387 = vmatmul.bf16.gmra.mxu0 %v348
    %v388 = vpop.f32.mrf.mxu0
    %v389 = vadd.f32 %v308, %v388
    %v390 = vpop.f32.mrf.mxu0
    %v391 = vadd.f32 %v308, %v390
    %392 = vmatmul.bf16.gmra.mxu0 %v351
    %v393 = vpop.f32.mrf.mxu0
    %v394 = vadd.f32 %v308, %v393
    %v395 = vpop.f32.mrf.mxu0
    %v396 = vadd.f32 %v308, %v395
    %397 = vmatmul.bf16.gmra.mxu0 %v354
    %v398 = vpop.f32.mrf.mxu0
    %v399 = vadd.f32 %v308, %v398
    %v400 = vpop.f32.mrf.mxu0
    %v401 = vadd.f32 %v308, %v400
    %402 = vmatmul.bf16.gmra.mxu0 %v357
    %v403 = vpop.f32.mrf.mxu0
    %v404 = vadd.f32 %v308, %v403
    %v405 = vpop.f32.mrf.mxu0
    %v406 = vadd.f32 %v308, %v405
    %407 = vdwg.mxu0
    %v408 = vmul.f32 %v369, 0.5
    %v409 = vmul.f32 %v371, 0.5
    %v410 = vmul.f32 %v374, 0.5
    %v411 = vmul.f32 %v376, 0.5
    %v412 = vmul.f32 %v379, 0.5
    %v413 = vmul.f32 %v381, 0.5
    %v414 = vmul.f32 %v384, 0.5
    %v415 = vmul.f32 %v386, 0.5
    %v416 = vmul.f32 %v389, 0.5
    %v417 = vmul.f32 %v391, 0.5
    %v418 = vmul.f32 %v394, 0.5
    %v419 = vmul.f32 %v396, 0.5
    %v420 = vmul.f32 %v399, 0.5
    %v421 = vmul.f32 %v401, 0.5
    %v422 = vmul.f32 %v404, 0.5
    %v423 = vmul.f32 %v406, 0.5
    %v424 = vmul.f32 %v369, 0.044715
    %v425 = vmul.f32 %v371, 0.044715
    %v426 = vmul.f32 %v374, 0.044715
    %v427 = vmul.f32 %v376, 0.044715
    %v428 = vmul.f32 %v379, 0.044715
    %v429 = vmul.f32 %v381, 0.044715
    %v430 = vmul.f32 %v384, 0.044715
    %v431 = vmul.f32 %v386, 0.044715
    %v432 = vmul.f32 %v389, 0.044715
    %v433 = vmul.f32 %v391, 0.044715
    %v434 = vmul.f32 %v394, 0.044715
    %v435 = vmul.f32 %v396, 0.044715
    %v436 = vmul.f32 %v399, 0.044715
    %v437 = vmul.f32 %v401, 0.044715
    %v438 = vmul.f32 %v404, 0.044715
    %v439 = vmul.f32 %v406, 0.044715
    %v440 = vmul.f32 %v424, %v369
    %v441 = vmul.f32 %v425, %v371
    %v442 = vmul.f32 %v426, %v374
    %v443 = vmul.f32 %v427, %v376
    %v444 = vmul.f32 %v428, %v379
    %v445 = vmul.f32 %v429, %v381
    %v446 = vmul.f32 %v430, %v384
    %v447 = vmul.f32 %v431, %v386
    %v448 = vmul.f32 %v432, %v389
    %v449 = vmul.f32 %v433, %v391
    %v450 = vmul.f32 %v434, %v394
    %v451 = vmul.f32 %v435, %v396
    %v452 = vmul.f32 %v436, %v399
    %v453 = vmul.f32 %v437, %v401
    %v454 = vmul.f32 %v438, %v404
    %v455 = vmul.f32 %v439, %v406
    %v456 = vmul.f32 %v440, %v369
    %v457 = vmul.f32 %v441, %v371
    %v458 = vmul.f32 %v442, %v374
    %v459 = vmul.f32 %v443, %v376
    %v460 = vmul.f32 %v444, %v379
    %v461 = vmul.f32 %v445, %v381
    %v462 = vmul.f32 %v446, %v384
    %v463 = vmul.f32 %v447, %v386
    %v464 = vmul.f32 %v448, %v389
    %v465 = vmul.f32 %v449, %v391
    %v466 = vmul.f32 %v450, %v394
    %v467 = vmul.f32 %v451, %v396
    %v468 = vmul.f32 %v452, %v399
    %v469 = vmul.f32 %v453, %v401
    %v470 = vmul.f32 %v454, %v404
    %v471 = vmul.f32 %v455, %v406
    %v472 = vadd.f32 %v369, %v456
    %v473 = vadd.f32 %v371, %v457
    %v474 = vadd.f32 %v374, %v458
    %v475 = vadd.f32 %v376, %v459
    %v476 = vadd.f32 %v379, %v460
    %v477 = vadd.f32 %v381, %v461
    %v478 = vadd.f32 %v384, %v462
    %v479 = vadd.f32 %v386, %v463
    %v480 = vadd.f32 %v389, %v464
    %v481 = vadd.f32 %v391, %v465
    %v482 = vadd.f32 %v394, %v466
    %v483 = vadd.f32 %v396, %v467
    %v484 = vadd.f32 %v399, %v468
    %v485 = vadd.f32 %v401, %v469
    %v486 = vadd.f32 %v404, %v470
    %v487 = vadd.f32 %v406, %v471
    %v488 = vmul.f32 %v472, 0.7978846
    %v489 = vmul.f32 %v473, 0.7978846
    %v490 = vmul.f32 %v474, 0.7978846
    %v491 = vmul.f32 %v475, 0.7978846
    %v492 = vmul.f32 %v476, 0.7978846
    %v493 = vmul.f32 %v477, 0.7978846
    %v494 = vmul.f32 %v478, 0.7978846
    %v495 = vmul.f32 %v479, 0.7978846
    %v496 = vmul.f32 %v480, 0.7978846
    %v497 = vmul.f32 %v481, 0.7978846
    %v498 = vmul.f32 %v482, 0.7978846
    %v499 = vmul.f32 %v483, 0.7978846
    %v500 = vmul.f32 %v484, 0.7978846
    %v501 = vmul.f32 %v485, 0.7978846
    %v502 = vmul.f32 %v486, 0.7978846
    %v503 = vmul.f32 %v487, 0.7978846
    %v504 = vtanh.pop %v488
    %v505 = vtanh.pop %v489
    %v506 = vtanh.pop %v490
    %v507 = vtanh.pop %v491
    %v508 = vtanh.pop %v492
    %v509 = vtanh.pop %v493
    %v510 = vtanh.pop %v494
    %v511 = vtanh.pop %v495
    %v512 = vtanh.pop %v496
    %v513 = vtanh.pop %v497
    %v514 = vtanh.pop %v498
    %v515 = vtanh.pop %v499
    %v516 = vtanh.pop %v500
    %v517 = vtanh.pop %v501
    %v518 = vtanh.pop %v502
    %v519 = vtanh.pop %v503
    %v520 = vadd.f32 %v504, 1.0
    %v521 = vadd.f32 %v505, 1.0
    %v522 = vadd.f32 %v506, 1.0
    %v523 = vadd.f32 %v507, 1.0
    %v524 = vadd.f32 %v508, 1.0
    %v525 = vadd.f32 %v509, 1.0
    %v526 = vadd.f32 %v510, 1.0
    %v527 = vadd.f32 %v511, 1.0
    %v528 = vadd.f32 %v512, 1.0
    %v529 = vadd.f32 %v513, 1.0
    %v530 = vadd.f32 %v514, 1.0
    %v531 = vadd.f32 %v515, 1.0
    %v532 = vadd.f32 %v516, 1.0
    %v533 = vadd.f32 %v517, 1.0
    %v534 = vadd.f32 %v518, 1.0
    %v535 = vadd.f32 %v519, 1.0
    %v536 = vmul.f32 %v408, %v520
    %v537 = vmul.f32 %v409, %v521
    %v538 = vmul.f32 %v410, %v522
    %v539 = vmul.f32 %v411, %v523
    %v540 = vmul.f32 %v412, %v524
    %v541 = vmul.f32 %v413, %v525
    %v542 = vmul.f32 %v414, %v526
    %v543 = vmul.f32 %v415, %v527
    %v544 = vmul.f32 %v416, %v528
    %v545 = vmul.f32 %v417, %v529
    %v546 = vmul.f32 %v418, %v530
    %v547 = vmul.f32 %v419, %v531
    %v548 = vmul.f32 %v420, %v532
    %v549 = vmul.f32 %v421, %v533
    %v550 = vmul.f32 %v422, %v534
    %v551 = vmul.f32 %v423, %v535
    %v552 = vld [vmem:[%s5] sm:$0xf]
    %v553 = vld [vmem:[%s6] sm:$0xff]
    %v554 = vpack.c.bf16 %v537, %v536
    %v555 = vpack.c.bf16 %v539, %v538
    %v556 = vpack.c.bf16 %v541, %v540
    %v557 = vpack.c.bf16 %v543, %v542
    %v558 = vpack.c.bf16 %v545, %v544
    %v559 = vpack.c.bf16 %v547, %v546
    %v560 = vpack.c.bf16 %v549, %v548
    %v561 = vpack.c.bf16 %v551, %v550
    %563 = vset.pattern.permute.xlu0 0
    %564 = vperm.xlu0 %563, %v553
    %v565 = vpop.permute.xlu0 %564
    %v568 = vsel %vm334, %v552, 0
    %v571 = vsel %vm334, %v554, 0
    %v574 = vsel %vm334, %v555, 0
    %v577 = vsel %vm334, %v556, 0
    %v580 = vsel %vm334, %v557, 0
    %v583 = vsel %vm334, %v558, 0
    %v586 = vsel %vm334, %v559, 0
    %v589 = vsel %vm334, %v560, 0
    %v592 = vsel %vm334, %v561, 0
    %594 = vmatpush.bf16.xpose.msra.mxu0 %v592
    %595 = vmatpush.bf16.xpose.msra.mxu0 %v589
    %596 = vmatpush.bf16.xpose.msra.mxu0 %v586
    %597 = vmatpush.bf16.xpose.msra.mxu0 %v583
    %598 = vmatpush.bf16.xpose.msra.mxu0 %v580
    %599 = vmatpush.bf16.xpose.msra.mxu0 %v577
    %600 = vmatpush.bf16.xpose.msra.mxu0 %v574
    %601 = vmatpush.bf16.xpose.msra.mxu0 %v571
    %602 = vmatmul.bf16.gmra.mxu0 %v568
    %v603 = vpop.f32.mrf.mxu0
    %v604 = vadd.f32 %v565, %v603
    %v605 = vpop.f32.mrf.mxu0
    %606 = vdwg.mxu0
    %607 = vst [vmem:[#allocation2] sm:$0xff] %v604
    // Predicated region
    $region30: #{tpu_custom_call.1} parent=1 // pred_check
      _
    $region31: #{tpu_custom_call.1} parent=1 // pred_check_branch
      %609 = sbr.rel (0) target = $region33
    $region32: #{tpu_custom_call.1} parent=1 // pred_region
      %611 = vsyncadd [#allocation3], 0
      %s613 = sshll.u32 [#allocation2], 4
      %s614 = int_to_ptr.vmem [resolvable:$true] %s613
      %s615 = sshll.u32 %s7, 4
      %s616 = int_to_ptr.hbm [resolvable:$true] %s615
      %618 = dma.vmem_to_hbm [thread:$0]  %s614, 128, %s616, [#allocation3]
    $region33: #{tpu_custom_call.1} parent=1 // pred_fallthru
      _
    // Predicated region
    $region34: #{tpu_custom_call.1} parent=1 // pred_check
      _
    $region35: #{tpu_custom_call.1} parent=1 // pred_check_branch
      %620 = sbr.rel (0) target = $region37
    $region36: #{tpu_custom_call.1} parent=1 // pred_region
      %622 = dma.done [#allocation3], 128
    $region37: #{tpu_custom_call.1} parent=1 // pred_fallthru
      _
    %623 = vsyncpa [#allocation3], 1

</llo_original>
